<compile_context>
chip_gen: v5e
topology: v5e:2x2
jax: 0.10.0
libtpu: 0.0.40
codegen_flags: <defaults>
</compile_context>

<pallas_src>
import jax
import jax.numpy as jnp
from jax.experimental import pallas as pl
from jax.experimental.pallas import tpu as pltpu

# Small shapes implied by the module (MuZero MLP policy head).
BATCH = 8          # sublane-full batch (perf feedback: B >= 8)
LATENT = 32        # latent_size
HIDDEN = 64        # hidden_size
ACTION = 4         # action_size


def _round_up(x, m):
    return ((x + m - 1) // m) * m


def _pack_params(w1, b1, w2, b2):
    """Pack all parameters into one lane-dense f32 slab.

    Row layout (all section offsets are multiples of 8 sublanes):
      [off_w1 : off_w1+L)        W1  (L, HID)  zero-padded to n_lane cols
      [off_b1]                   b1  zero-padded to n_lane
      [off_w2 : off_w2+n_lane)   W2  (HID, A) zero-padded to (n_lane, n_lane)
      [off_b2]                   b2  zero-padded to n_lane
    """
    L, HID = w1.shape
    HID2, A = w2.shape
    assert HID2 == HID and b1.shape == (HID,) and b2.shape == (A,)

    n_lane = max(_round_up(HID, 128), _round_up(A, 128), 128)
    off_w1 = 0
    off_b1 = _round_up(L, 8)
    off_w2 = off_b1 + 8
    off_b2 = off_w2 + n_lane
    total_rows = off_b2 + 8

    slab = jnp.zeros((total_rows, n_lane), jnp.float32)
    slab = slab.at[off_w1:off_w1 + L, :HID].set(w1.astype(jnp.float32))
    slab = slab.at[off_b1, :HID].set(b1.astype(jnp.float32))
    slab = slab.at[off_w2:off_w2 + HID, :A].set(w2.astype(jnp.float32))
    slab = slab.at[off_b2, :A].set(b2.astype(jnp.float32))
    meta = dict(L=L, HID=HID, A=A, n_lane=n_lane,
                off_w1=off_w1, off_b1=off_b1, off_w2=off_w2, off_b2=off_b2,
                total_rows=total_rows)
    return slab, meta


def _make_kernel(meta):
    L = meta["L"]
    n_lane = meta["n_lane"]
    off_w1, off_b1 = meta["off_w1"], meta["off_b1"]
    off_w2, off_b2 = meta["off_w2"], meta["off_b2"]

    def kernel(x_ref, p_ref, o_ref):
        x = x_ref[...]                                        # (BM, L)
        w1 = p_ref[off_w1:off_w1 + L, :]                      # (L, n_lane)
        b1 = p_ref[off_b1:off_b1 + 1, :]                      # (1, n_lane)
        h = jnp.maximum(
            jnp.dot(x, w1, preferred_element_type=jnp.float32) + b1, 0.0)
        # Lanes >= HID of h are relu(0) == 0, and rows >= HID of w2 are 0,
        # so the full-width matmul below is exact (no activation slicing).
        w2 = p_ref[off_w2:off_w2 + n_lane, :]                 # (n_lane, n_lane)
        b2 = p_ref[off_b2:off_b2 + 1, :]                      # (1, n_lane)
        o_ref[...] = jnp.dot(h, w2, preferred_element_type=jnp.float32) + b2

    return kernel


def policy_network(x, w1, b1, w2, b2):
    """Fused Pallas forward of PolicyNetwork.

    x:  (B, latent_size) f32
    w1: (latent_size, hidden_size), b1: (hidden_size,)
    w2: (hidden_size, action_size), b2: (action_size,)
    returns logits (B, action_size) f32
    """
    B, L = x.shape
    slab, meta = _pack_params(w1, b1, w2, b2)
    n_lane, A = meta["n_lane"], meta["A"]
    total_rows = meta["total_rows"]

    # Pad batch to sublane-full tiles; tile over a parallel grid axis.
    Bp = _round_up(B, 8)
    BM = 128 if Bp >= 128 else Bp
    Bp = _round_up(Bp, BM)
    x_pad = jnp.zeros((Bp, L), jnp.float32).at[:B, :].set(x.astype(jnp.float32))

    kernel = _make_kernel(meta)
    out = pl.pallas_call(
        kernel,
        grid=(Bp // BM,),
        in_specs=[
            pl.BlockSpec((BM, L), lambda i: (i, 0)),            # batch tile
            pl.BlockSpec((total_rows, n_lane), lambda i: (0, 0)),  # params: VMEM-resident
        ],
        out_specs=pl.BlockSpec((BM, n_lane), lambda i: (i, 0)),   # lane-dense output
        out_shape=jax.ShapeDtypeStruct((Bp, n_lane), jnp.float32),
        compiler_params=pltpu.CompilerParams(
            dimension_semantics=("parallel",)),
    )(x_pad, slab)

    return out[:B, :A]


def _reference(x, w1, b1, w2, b2):
    h = jnp.maximum(x @ w1 + b1, 0.0)
    return h @ w2 + b2


if __name__ == "__main__":
    key = jax.random.PRNGKey(0)
    kx, k1, k2, k3, k4 = jax.random.split(key, 5)

    # PyTorch-style uniform(+/- 1/sqrt(fan_in)) init.
    def lin(k, fan_in, shape):
        bound = 1.0 / jnp.sqrt(jnp.float32(fan_in))
        return jax.random.uniform(k, shape, jnp.float32, -bound, bound)

    x = jax.random.normal(kx, (BATCH, LATENT), jnp.float32)
    w1 = lin(k1, LATENT, (LATENT, HIDDEN))
    b1 = lin(k2, LATENT, (HIDDEN,))
    w2 = lin(k3, HIDDEN, (HIDDEN, ACTION))
    b2 = lin(k4, HIDDEN, (ACTION,))

    out = policy_network(x, w1, b1, w2, b2)
    out = jax.block_until_ready(out)

    ref = _reference(x, w1, b1, w2, b2)
    assert out.shape == (BATCH, ACTION)
    assert jnp.allclose(out, ref, atol=1e-4, rtol=1e-4)

    print("KERNEL_OK")
</pallas_src>

<mosaic_0001>
module attributes {stable_mosaic.version = 11 : i64} {
  func.func @kernel(%arg0: i32, %arg1: memref<8x32xf32, #tpu.memory_space<vmem>>, %arg2: memref<176x128xf32, #tpu.memory_space<vmem>>, %arg3: memref<8x128xf32, #tpu.memory_space<vmem>>) attributes {dimension_semantics = [#tpu.dimension_semantics<parallel>], iteration_bounds = array<i64: 1>, scalar_prefetch = 0 : i64, scratch_operands = 0 : i64, tpu.core_type = #tpu.core_type<tc>, window_params = [{transform_indices = @transform_0, window_bounds = array<i64: 8, 32>}, {pipeline_mode = #tpu.pipeline_mode<synchronous>, transform_indices = @transform_1, window_bounds = array<i64: 176, 128>}, {transform_indices = @transform_2, window_bounds = array<i64: 8, 128>}]} {
    %c0 = arith.constant 0 : index
    %c0_0 = arith.constant 0 : index
    %0 = vector.load %arg1[%c0, %c0_0] : memref<8x32xf32, #tpu.memory_space<vmem>>, vector<8x32xf32>
    %c0_1 = arith.constant 0 : index
    %c0_2 = arith.constant 0 : index
    %1 = vector.load %arg2[%c0_1, %c0_2] : memref<176x128xf32, #tpu.memory_space<vmem>>, vector<32x128xf32>
    %c32 = arith.constant 32 : index
    %c0_3 = arith.constant 0 : index
    %2 = vector.load %arg2[%c32, %c0_3] : memref<176x128xf32, #tpu.memory_space<vmem>>, vector<1x128xf32>
    %cst = arith.constant dense<0.000000e+00> : vector<8x128xf32>
    %3 = tpu.matmul %0, %1, %cst {dimension_numbers = #tpu.dot_dimension_numbers<[1], [0], [0], [1], [0, 0, 1, 1], [], []>} : vector<8x32xf32>, vector<32x128xf32>, vector<8x128xf32> -> vector<8x128xf32>
    %4 = vector.broadcast %2 : vector<1x128xf32> to vector<8x128xf32>
    %5 = arith.addf %3, %4 : vector<8x128xf32>
    %cst_4 = arith.constant 0.000000e+00 : f32
    %6 = vector.broadcast %cst_4 : f32 to vector<8x128xf32>
    %7 = arith.maximumf %5, %6 : vector<8x128xf32>
    %c40 = arith.constant 40 : index
    %c0_5 = arith.constant 0 : index
    %8 = vector.load %arg2[%c40, %c0_5] : memref<176x128xf32, #tpu.memory_space<vmem>>, vector<128x128xf32>
    %c168 = arith.constant 168 : index
    %c0_6 = arith.constant 0 : index
    %9 = vector.load %arg2[%c168, %c0_6] : memref<176x128xf32, #tpu.memory_space<vmem>>, vector<1x128xf32>
    %cst_7 = arith.constant dense<0.000000e+00> : vector<8x128xf32>
    %10 = tpu.matmul %7, %8, %cst_7 {dimension_numbers = #tpu.dot_dimension_numbers<[1], [0], [0], [1], [0, 0, 1, 1], [], []>} : vector<8x128xf32>, vector<128x128xf32>, vector<8x128xf32> -> vector<8x128xf32>
    %11 = vector.broadcast %9 : vector<1x128xf32> to vector<8x128xf32>
    %12 = arith.addf %10, %11 : vector<8x128xf32>
    %c0_8 = arith.constant 0 : index
    %c0_9 = arith.constant 0 : index
    %13 = vector.load %arg3[%c0_8, %c0_9] : memref<8x128xf32, #tpu.memory_space<vmem>>, vector<8x128xf32>
    tpu.vector_store %arg3[%c0_8, %c0_9], %12 {strides = array<i32>} : memref<8x128xf32, #tpu.memory_space<vmem>>, vector<8x128xf32>,
    return
  }
  func.func @transform_0(%arg0: i32) -> (i32, i32) {
    %c0_i32 = arith.constant 0 : i32
    %c0_i32_0 = arith.constant 0 : i32
    return %arg0, %c0_i32 : i32, i32
  }
  func.func @transform_1(%arg0: i32) -> (i32, i32) {
    %c0_i32 = arith.constant 0 : i32
    %c0_i32_0 = arith.constant 0 : i32
    %c0_i32_1 = arith.constant 0 : i32
    return %c0_i32, %c0_i32_0 : i32, i32
  }
  func.func @transform_2(%arg0: i32) -> (i32, i32) {
    %c0_i32 = arith.constant 0 : i32
    %c0_i32_0 = arith.constant 0 : i32
    return %arg0, %c0_i32 : i32, i32
  }
}

</mosaic_0001>

<llo_original>
// kernel: tpu_custom_call.1
$region0: #{tpu_custom_call.1}
  #allocation0 [shape = 'u32[]', space=smem, size = 0x4, offset = 0x4, fixed_abs, tag = 'smem constant byte address 0x4 - core index']
  #allocation1 [shape = 'u32[72,128]{1,0:T(1,128)}', space=vmem, size = 0x9000, scoped, tag = 'internal scratch']
  %s0 = inlined_call_operand.hbm [shape: f32[8,32], index: 0, kind: input, shape index: {}]
  %s1 = inlined_call_operand.hbm [shape: f32[176,128], index: 1, kind: input, shape index: {}]
  %s2 = inlined_call_operand.hbm [shape: f32[8,128], index: 2, kind: output, shape index: {}]
  %s3 = sld [smem:[#allocation0]]
  $region26: #{tpu_custom_call.1} parent=0
    _
  %s5 = ssub.s32 1, %s3
  %s6 = scalar_select 0, %s5, %s3
  $region1: #{tpu_custom_call.1} parent=0
    #allocation2 [shape = 'u8[4096]{0}', space=vmem, size = 0x1000, scoped, tag = 'input window, operand 0, single buffered']
    #allocation3 [shape = 's32[1]{0}', space=sflag, size = 0x4, scoped, tag = 'scoped memory for tpu_custom_call.1']
    #allocation4 [shape = 's32[1]{0}', space=sflag, size = 0x4, scoped, tag = 'scoped memory for tpu_custom_call.1']
    #allocation5 [shape = 'u8[90112]{0}', space=vmem, size = 0x16000, scoped, tag = 'input window, operand 1, single buffered']
    #allocation6 [shape = 's32[1]{0}', space=sflag, size = 0x4, scoped, tag = 'scoped memory for tpu_custom_call.1']
    #allocation7 [shape = 'u8[4096]{0}', space=vmem, size = 0x1000, scoped, tag = 'output window, operand 0, single buffered']
    %7 = vsyncpa [#allocation3], 0
    %8 = vsyncpa [#allocation6], 0
    %9 = vsyncpa [#allocation4], 0
    // Predicated region
    $region2: #{tpu_custom_call.1} parent=1 // pred_check
      _
    $region3: #{tpu_custom_call.1} parent=1 // pred_check_branch
      %11 = sbr.rel (0) target = $region5
    $region4: #{tpu_custom_call.1} parent=1 // pred_region
      %13 = vsyncadd [#allocation3], 0
      %s15 = sshll.u32 %s0, 4
      %s16 = int_to_ptr.hbm [resolvable:$true] %s15
      %s17 = sshll.u32 [#allocation2], 4
      %s18 = int_to_ptr.vmem [resolvable:$true] %s17
      %20 = dma.hbm_to_vmem [thread:$0]  %s16, 128, %s18, [#allocation3]
    $region5: #{tpu_custom_call.1} parent=1 // pred_fallthru
      _
    // Predicated region
    $region6: #{tpu_custom_call.1} parent=1 // pred_check
      _
    $region7: #{tpu_custom_call.1} parent=1 // pred_check_branch
      %22 = sbr.rel (0) target = $region9
    $region8: #{tpu_custom_call.1} parent=1 // pred_region
      %24 = vsyncadd [#allocation6], 0
      %s25 = sshll.u32 %s1, 4
      %s26 = int_to_ptr.hbm [resolvable:$true] %s25
      %s27 = sshll.u32 [#allocation5], 4
      %s28 = int_to_ptr.vmem [resolvable:$true] %s27
      %33 = dma.hbm_to_vmem [thread:$0]  %s26, 2816, %s28, [#allocation6], 128, 128, 8
    $region9: #{tpu_custom_call.1} parent=1 // pred_fallthru
      _
    // Predicated region
    $region10: #{tpu_custom_call.1} parent=1 // pred_check
      _
    $region11: #{tpu_custom_call.1} parent=1 // pred_check_branch
      %35 = sbr.rel (0) target = $region13
    $region12: #{tpu_custom_call.1} parent=1 // pred_region
      %37 = dma.done [#allocation3], 128
    $region13: #{tpu_custom_call.1} parent=1 // pred_fallthru
      _
    // Predicated region
    $region14: #{tpu_custom_call.1} parent=1 // pred_check
      _
    $region15: #{tpu_custom_call.1} parent=1 // pred_check_branch
      %39 = sbr.rel (0) target = $region17
    $region16: #{tpu_custom_call.1} parent=1 // pred_region
      %41 = dma.done [#allocation6], 2816
    $region17: #{tpu_custom_call.1} parent=1 // pred_fallthru
      _
    %v42 = vld [vmem:[#allocation2] sm:$0xff]
    %v43 = vld [vmem:[#allocation5] sm:$0xff]
    %v44 = vld [vmem:[#allocation5 + $0x8] sm:$0xff]
    %v45 = vld [vmem:[#allocation5 + $0x10] sm:$0xff]
    %v46 = vld [vmem:[#allocation5 + $0x18] sm:$0xff]
    %v47 = vld [vmem:[#allocation5 + $0x20] sm:$0x1]
    %v48 = vperm.slane %v47, 0
    %vm49 = vcmask 261120
    %v51 = vsel %vm49, %v42, 0
    %53 = vmatpush.msra.mxu0 0.0
    %54 = vmatpush.msra.mxu0 0.0
    %55 = vmatpush.msra.mxu0 0.0
    %56 = vmatpush.msra.mxu0 0.0
    %57 = vmatpush.msra.mxu0 0.0
    %58 = vmatpush.msra.mxu0 0.0
    %59 = vmatpush.msra.mxu0 0.0
    %60 = vmatpush.msra.mxu0 0.0
    %61 = vmatpush.msra.mxu0 0.0
    %62 = vmatpush.msra.mxu0 0.0
    %63 = vmatpush.msra.mxu0 0.0
    %64 = vmatpush.msra.mxu0 0.0
    %65 = vmatpush.msra.mxu0 %v46
    %66 = vmatpush.msra.mxu0 %v45
    %67 = vmatpush.msra.mxu0 %v44
    %68 = vmatpush.msra.mxu0 %v43
    %69 = vmatmul.f32.gmra.mxu0 %v51
    %v70 = vpop.f32.mrf.mxu0
    %v71 = vadd.f32 %v48, %v70
    %72 = vdwg.mxu0
    %v73 = vmax.f32 %v71, 0.0
    %v74 = vld [vmem:[#allocation5 + $0x28] sm:$0xff]
    %v75 = vld [vmem:[#allocation5 + $0x30] sm:$0xff]
    %v76 = vld [vmem:[#allocation5 + $0x38] sm:$0xff]
    %v77 = vld [vmem:[#allocation5 + $0x40] sm:$0xff]
    %v78 = vld [vmem:[#allocation5 + $0x48] sm:$0xff]
    %v79 = vld [vmem:[#allocation5 + $0x50] sm:$0xff]
    %v80 = vld [vmem:[#allocation5 + $0x58] sm:$0xff]
    %v81 = vld [vmem:[#allocation5 + $0x60] sm:$0xff]
    %v82 = vld [vmem:[#allocation5 + $0x68] sm:$0xff]
    %v83 = vld [vmem:[#allocation5 + $0x70] sm:$0xff]
    %v84 = vld [vmem:[#allocation5 + $0x78] sm:$0xff]
    %v85 = vld [vmem:[#allocation5 + $0x80] sm:$0xff]
    %v86 = vld [vmem:[#allocation5 + $0x88] sm:$0xff]
    %v87 = vld [vmem:[#allocation5 + $0x90] sm:$0xff]
    %v88 = vld [vmem:[#allocation5 + $0x98] sm:$0xff]
    %v89 = vld [vmem:[#allocation5 + $0xa0] sm:$0xff]
    %v90 = vld [vmem:[#allocation5 + $0xa8] sm:$0x1]
    %v91 = vperm.slane %v90, 0
    %92 = vmatpush.msra.mxu0 %v89
    %93 = vmatpush.msra.mxu0 %v88
    %94 = vmatpush.msra.mxu0 %v87
    %95 = vmatpush.msra.mxu0 %v86
    %96 = vmatpush.msra.mxu0 %v85
    %97 = vmatpush.msra.mxu0 %v84
    %98 = vmatpush.msra.mxu0 %v83
    %99 = vmatpush.msra.mxu0 %v82
    %100 = vmatpush.msra.mxu0 %v81
    %101 = vmatpush.msra.mxu0 %v80
    %102 = vmatpush.msra.mxu0 %v79
    %103 = vmatpush.msra.mxu0 %v78
    %104 = vmatpush.msra.mxu0 %v77
    %105 = vmatpush.msra.mxu0 %v76
    %106 = vmatpush.msra.mxu0 %v75
    %107 = vmatpush.msra.mxu0 %v74
    %108 = vmatmul.f32.gmra.mxu0 %v73
    %v109 = vpop.f32.mrf.mxu0
    %v110 = vadd.f32 %v91, %v109
    %111 = vdwg.mxu0
    %112 = vst [vmem:[#allocation7] sm:$0xff] %v110
    // Predicated region
    $region18: #{tpu_custom_call.1} parent=1 // pred_check
      _
    $region19: #{tpu_custom_call.1} parent=1 // pred_check_branch
      %114 = sbr.rel (0) target = $region21
    $region20: #{tpu_custom_call.1} parent=1 // pred_region
      %116 = vsyncadd [#allocation4], 0
      %s118 = sshll.u32 [#allocation7], 4
      %s119 = int_to_ptr.vmem [resolvable:$true] %s118
      %s120 = sshll.u32 %s2, 4
      %s121 = int_to_ptr.hbm [resolvable:$true] %s120
      %123 = dma.vmem_to_hbm [thread:$0]  %s119, 128, %s121, [#allocation4]
    $region21: #{tpu_custom_call.1} parent=1 // pred_fallthru
      _
    // Predicated region
    $region22: #{tpu_custom_call.1} parent=1 // pred_check
      _
    $region23: #{tpu_custom_call.1} parent=1 // pred_check_branch
      %125 = sbr.rel (0) target = $region25
    $region24: #{tpu_custom_call.1} parent=1 // pred_region
      %127 = dma.done [#allocation4], 128
    $region25: #{tpu_custom_call.1} parent=1 // pred_fallthru
      _
    %128 = vsyncpa [#allocation3], 1
    %129 = vsyncpa [#allocation6], 1
    %130 = vsyncpa [#allocation4], 1

</llo_original>
